<compile_context>
chip_gen: v6e
topology: v6e:2x2x1
jax: 0.10.0
libtpu: 0.0.40
codegen_flags: <defaults>
</compile_context>

<pallas_src>
import functools

import jax
import jax.numpy as jnp
from jax import lax
from jax.experimental import pallas as pl
from jax.experimental.pallas import tpu as pltpu

ENERGY_REGULARIZATION = 0.01

# Lane width of the per-block partial (one vreg row -> unmasked vst).
_OUT_LANES = 128

# Candidate (max row-tile, grid semantics) configs, best first.  The first one
# that compiles + runs on the local chip is cached and reused.
#   TM=4096: 2 inputs x 2 pipeline bufs x 4 MiB = 16 MiB plus ~2 live [TM,V]
#   f32 temporaries (~8 MiB) -> fits the explicit VMEM limits below on every
#   generation.  CORE_PARALLEL shards the single grid axis across both v7x
#   TensorCores; harmless on single-TC v5e/v6e, and if the installed JAX or
#   chip rejects it we fall back to "parallel", then to smaller tiles.
_CORE_PARALLEL = getattr(pltpu, "CORE_PARALLEL", None)
_CONFIGS = []
if _CORE_PARALLEL is not None:
    _CONFIGS.append((4096, _CORE_PARALLEL))
_CONFIGS += [(4096, "parallel"), (2048, "parallel"), (1024, "parallel")]

_chosen_config = None  # filled in after the first successful call


def _round_up(x, m):
    return ((x + m - 1) // m) * m


def _vmem_limit_bytes():
    # Perf review: 48 MiB on v5e/v6e (128 MiB physical VMEM), 40 MiB on v7x
    # (64 MiB physical per TensorCore).
    try:
        kind = jax.devices()[0].device_kind.lower()
    except Exception:  # pragma: no cover - defensive
        kind = ""
    return (40 << 20) if "7" in kind else (48 << 20)


def _choose_tile(rows, tm_max):
    """Returns (tm, need_mask, num_blocks)."""
    if rows <= 1024:
        # Single block whose shape equals the full array dims: always legal,
        # no masking needed.
        return rows, False, 1
    # Aim for >= 2 blocks so a multi-TensorCore chip can split the grid.
    tm = min(tm_max, _round_up(pl.cdiv(rows, 2), 256))
    need_mask = (rows % tm) != 0
    return tm, need_mask, pl.cdiv(rows, tm)


def _make_kl_partial_kernel(tm, v, rows, need_mask):
    """Per-block KL partial: one scalar per block, stored lane-dense (1, 128).

    Uses the algebraically simplified per-row KL
        kl_row = sum(e_t * (t - p)) / sum(e_t) + (p_lse - t_lse)
    which avoids materializing log_softmax(p), log(softmax(t)) and the
    normalized softmax(t) as full [TM, V] temporaries.
    """

    def kernel(pred_ref, tgt_ref, out_ref):
        p = pred_ref[...].astype(jnp.float32)   # [TM, V]
        t = tgt_ref[...].astype(jnp.float32)    # [TM, V]

        # logsumexp(predictions) per row.
        p_max = jnp.max(p, axis=-1, keepdims=True)                       # [TM,1]
        p_lse = jnp.log(jnp.sum(jnp.exp(p - p_max), axis=-1,
                                keepdims=True)) + p_max                  # [TM,1]

        # exp-shifted targets; e_t reused for both the normalizer and the
        # cross-entropy-style numerator (only 2 exps / element in total).
        t_max = jnp.max(t, axis=-1, keepdims=True)                       # [TM,1]
        e_t = jnp.exp(t - t_max)                                         # [TM,V]
        sum_t = jnp.sum(e_t, axis=-1, keepdims=True)                     # [TM,1]
        t_lse = jnp.log(sum_t) + t_max                                   # [TM,1]

        num = jnp.sum(e_t * (t - p), axis=-1, keepdims=True)             # [TM,1]
        kl_row = num * pl.reciprocal(sum_t, approx=False) + (p_lse - t_lse)

        if need_mask:
            # Tail tile only: rows past `rows` hold unspecified data.  A
            # select on the [TM, 1] per-row result (BEFORE the cross-row sum)
            # kills any NaN/Inf originating from those garbage rows while
            # staying off the [TM, V] hot path.
            i = pl.program_id(0)
            row_ids = i * tm + lax.broadcasted_iota(jnp.int32, (tm, 1), 0)
            kl_row = jnp.where(row_ids < rows, kl_row, 0.0)

        block_sum = jnp.sum(kl_row, axis=0, keepdims=True)               # [1,1]
        # Lane-dense (1, 128) store (unmasked vst); the wrapper reads lane 0.
        out_ref[...] = jnp.broadcast_to(block_sum, (1, _OUT_LANES))

    return kernel


@functools.lru_cache(maxsize=None)
def _get_loss_fn(shape, dtype_a, dtype_b, has_energy, energy_regularization,
                 tm_max, semantics):
    """Builds (and jit-caches) the loss fn for one (shape, dtype, config)."""
    B, S, V = shape
    rows = B * S
    tm, need_mask, num_blocks = _choose_tile(rows, tm_max)
    # A 1-block grid has nothing to shard across cores.
    sem = "arbitrary" if num_blocks == 1 else semantics

    itemsize = jnp.dtype(dtype_a).itemsize + jnp.dtype(dtype_b).itemsize
    cost = pl.CostEstimate(
        flops=10 * rows * V,
        transcendentals=2 * rows * V,
        bytes_accessed=rows * V * itemsize + num_blocks * _OUT_LANES * 4,
    )

    partial_call = pl.pallas_call(
        _make_kl_partial_kernel(tm, V, rows, need_mask),
        out_shape=jax.ShapeDtypeStruct((num_blocks, _OUT_LANES), jnp.float32),
        grid_spec=pltpu.PrefetchScalarGridSpec(
            num_scalar_prefetch=0,
            grid=(num_blocks,),
            in_specs=[
                pl.BlockSpec((tm, V), lambda i: (i, 0)),
                pl.BlockSpec((tm, V), lambda i: (i, 0)),
            ],
            out_specs=pl.BlockSpec((1, _OUT_LANES), lambda i: (i, 0)),
        ),
        compiler_params=pltpu.CompilerParams(
            dimension_semantics=(sem,),
            vmem_limit_bytes=_vmem_limit_bytes(),
        ),
        cost_estimate=cost,
    )

    if has_energy:
        def fn(predictions, targets, energy_values):
            partials = partial_call(predictions.reshape(rows, V),
                                    targets.reshape(rows, V))
            kl = jnp.sum(partials[:, 0]) / jnp.float32(B)  # 'batchmean': / B
            return kl + energy_regularization * jnp.mean(
                energy_values.astype(jnp.float32))
    else:
        def fn(predictions, targets):
            partials = partial_call(predictions.reshape(rows, V),
                                    targets.reshape(rows, V))
            return jnp.sum(partials[:, 0]) / jnp.float32(B)

    return jax.jit(fn)


def open_grammar_loss(predictions, targets, energy_values=None,
                      energy_regularization=ENERGY_REGULARIZATION):
    """predictions, targets: [B, S, V] (f32 or bf16); energy_values: optional [1].

    Note: call this eagerly at least once per shape so the config fallback can
    pick a configuration that compiles on the local chip (cached afterwards).
    """
    global _chosen_config
    shape = tuple(int(d) for d in predictions.shape)
    if len(shape) != 3:
        raise ValueError(f"expected [B, seq_len, vocab] inputs, got {shape}")
    has_energy = energy_values is not None
    args = ((predictions, targets, energy_values) if has_energy
            else (predictions, targets))

    configs = list(_CONFIGS)
    if _chosen_config in configs:
        configs.remove(_chosen_config)
        configs.insert(0, _chosen_config)

    last_err = None
    for cfg in configs:
        tm_max, semantics = cfg
        fn = _get_loss_fn(shape, str(predictions.dtype), str(targets.dtype),
                          has_energy, float(energy_regularization),
                          tm_max, semantics)
        try:
            out = fn(*args)
        except Exception as e:  # lowering / VMEM failure -> try a safer config
            last_err = e
            continue
        _chosen_config = cfg
        return out
    raise last_err


def _reference_loss(predictions, targets, energy_values=None,
                    energy_regularization=ENERGY_REGULARIZATION):
    log_q = jax.nn.log_softmax(predictions.astype(jnp.float32), axis=-1)
    p_tgt = jax.nn.softmax(targets.astype(jnp.float32), axis=-1)
    kl = jnp.sum(p_tgt * (jnp.log(p_tgt) - log_q)) / predictions.shape[0]
    if energy_values is not None:
        kl = kl + energy_regularization * jnp.mean(
            energy_values.astype(jnp.float32))
    return kl


if __name__ == "__main__":
    key = jax.random.PRNGKey(0)
    k1, k2, k3, k4, k5 = jax.random.split(key, 5)

    # Small shape matching the module spec ([B, seq_len, 256]).
    B, S, V = 2, 8, 256
    predictions = jax.random.normal(k1, (B, S, V), dtype=jnp.float32)
    targets = jax.random.normal(k2, (B, S, V), dtype=jnp.float32)
    energy_values = jax.random.normal(k3, (1,), dtype=jnp.float32)

    loss = jax.block_until_ready(
        open_grammar_loss(predictions, targets, energy_values))
    ref = _reference_loss(predictions, targets, energy_values)
    assert jnp.allclose(loss, ref, rtol=1e-4, atol=1e-5), (loss, ref)

    # No-energy path.
    loss_ne = jax.block_until_ready(open_grammar_loss(predictions, targets))
    ref_ne = _reference_loss(predictions, targets)
    assert jnp.allclose(loss_ne, ref_ne, rtol=1e-4, atol=1e-5), (loss_ne, ref_ne)

    # Multi-block + masked-tail (+ core-parallel on v7x) path:
    # rows = 5 * 1000 = 5000 -> two 2560-row tiles, second tile partially valid.
    B2, S2 = 5, 1000
    pred_big = jax.random.normal(k4, (B2, S2, V), dtype=jnp.float32)
    tgt_big = jax.random.normal(k5, (B2, S2, V), dtype=jnp.float32)
    loss_big = jax.block_until_ready(open_grammar_loss(pred_big, tgt_big))
    ref_big = _reference_loss(pred_big, tgt_big)
    assert jnp.allclose(loss_big, ref_big, rtol=1e-4, atol=1e-4), (loss_big, ref_big)

    # bf16 inputs (halve HBM traffic; upcast happens in-kernel).
    pred_bf = pred_big.astype(jnp.bfloat16)
    tgt_bf = tgt_big.astype(jnp.bfloat16)
    loss_bf = jax.block_until_ready(open_grammar_loss(pred_bf, tgt_bf))
    ref_bf = _reference_loss(pred_bf, tgt_bf)
    assert jnp.allclose(loss_bf, ref_bf, rtol=1e-3, atol=1e-3), (loss_bf, ref_bf)

    print("KERNEL_OK")
</pallas_src>

<mosaic_0001>
module attributes {stable_mosaic.version = 11 : i64} {
  func.func @kernel(%arg0: i32, %arg1: memref<16x256xf32, #tpu.memory_space<vmem>>, %arg2: memref<16x256xf32, #tpu.memory_space<vmem>>, %arg3: memref<1x128xf32, #tpu.memory_space<vmem>>) attributes {dimension_semantics = [#tpu.dimension_semantics<arbitrary>], iteration_bounds = array<i64: 1>, scalar_prefetch = 0 : i64, scratch_operands = 0 : i64, tpu.core_type = #tpu.core_type<tc>, window_params = [{transform_indices = @transform_0, window_bounds = array<i64: 16, 256>}, {transform_indices = @transform_1, window_bounds = array<i64: 16, 256>}, {transform_indices = @transform_2, window_bounds = array<i64: 1, 128>}]} {
    %c0 = arith.constant 0 : index
    %c0_0 = arith.constant 0 : index
    %0 = vector.load %arg1[%c0, %c0_0] : memref<16x256xf32, #tpu.memory_space<vmem>>, vector<16x256xf32>
    %c0_1 = arith.constant 0 : index
    %c0_2 = arith.constant 0 : index
    %1 = vector.load %arg2[%c0_1, %c0_2] : memref<16x256xf32, #tpu.memory_space<vmem>>, vector<16x256xf32>
    %cst = arith.constant dense<0xFF800000> : vector<16xf32>
    %2 = vector.multi_reduction <maximumf>, %0, %cst [1] : vector<16x256xf32> to vector<16xf32>
    %3 = vector.shape_cast %2 : vector<16xf32> to vector<16x1xf32>
    %4 = vector.broadcast %3 : vector<16x1xf32> to vector<16x256xf32>
    %5 = arith.subf %0, %4 : vector<16x256xf32>
    %6 = math.exp %5 : vector<16x256xf32>
    %cst_3 = arith.constant dense<0.000000e+00> : vector<16xf32>
    %7 = vector.multi_reduction <add>, %6, %cst_3 [1] : vector<16x256xf32> to vector<16xf32>
    %8 = vector.shape_cast %7 : vector<16xf32> to vector<16x1xf32>
    %9 = math.log %8 : vector<16x1xf32>
    %10 = arith.addf %9, %3 : vector<16x1xf32>
    %cst_4 = arith.constant dense<0xFF800000> : vector<16xf32>
    %11 = vector.multi_reduction <maximumf>, %1, %cst_4 [1] : vector<16x256xf32> to vector<16xf32>
    %12 = vector.shape_cast %11 : vector<16xf32> to vector<16x1xf32>
    %13 = vector.broadcast %12 : vector<16x1xf32> to vector<16x256xf32>
    %14 = arith.subf %1, %13 : vector<16x256xf32>
    %15 = math.exp %14 : vector<16x256xf32>
    %cst_5 = arith.constant dense<0.000000e+00> : vector<16xf32>
    %16 = vector.multi_reduction <add>, %15, %cst_5 [1] : vector<16x256xf32> to vector<16xf32>
    %17 = vector.shape_cast %16 : vector<16xf32> to vector<16x1xf32>
    %18 = math.log %17 : vector<16x1xf32>
    %19 = arith.addf %18, %12 : vector<16x1xf32>
    %20 = arith.subf %1, %0 : vector<16x256xf32>
    %21 = arith.mulf %15, %20 : vector<16x256xf32>
    %cst_6 = arith.constant dense<0.000000e+00> : vector<16xf32>
    %22 = vector.multi_reduction <add>, %21, %cst_6 [1] : vector<16x256xf32> to vector<16xf32>
    %23 = vector.shape_cast %22 : vector<16xf32> to vector<16x1xf32>
    %24 = tpu.reciprocal %17 : vector<16x1xf32> -> vector<16x1xf32>
    %25 = arith.mulf %23, %24 : vector<16x1xf32>
    %26 = arith.subf %10, %19 : vector<16x1xf32>
    %27 = arith.addf %25, %26 : vector<16x1xf32>
    %cst_7 = arith.constant dense<0.000000e+00> : vector<1xf32>
    %28 = vector.multi_reduction <add>, %27, %cst_7 [0] : vector<16x1xf32> to vector<1xf32>
    %29 = vector.shape_cast %28 : vector<1xf32> to vector<1x1xf32>
    %30 = vector.shape_cast %29 : vector<1x1xf32> to vector<1x1xf32>
    %31 = vector.broadcast %30 : vector<1x1xf32> to vector<1x128xf32>
    %c0_8 = arith.constant 0 : index
    %c0_9 = arith.constant 0 : index
    %32 = vector.load %arg3[%c0_8, %c0_9] : memref<1x128xf32, #tpu.memory_space<vmem>>, vector<1x128xf32>
    tpu.vector_store %arg3[%c0_8, %c0_9], %31 {strides = array<i32>} : memref<1x128xf32, #tpu.memory_space<vmem>>, vector<1x128xf32>,
    return
  }
  func.func @transform_0(%arg0: i32) -> (i32, i32) {
    %c0_i32 = arith.constant 0 : i32
    %c0_i32_0 = arith.constant 0 : i32
    return %arg0, %c0_i32 : i32, i32
  }
  func.func @transform_1(%arg0: i32) -> (i32, i32) {
    %c0_i32 = arith.constant 0 : i32
    %c0_i32_0 = arith.constant 0 : i32
    return %arg0, %c0_i32 : i32, i32
  }
  func.func @transform_2(%arg0: i32) -> (i32, i32) {
    %c0_i32 = arith.constant 0 : i32
    %c0_i32_0 = arith.constant 0 : i32
    return %arg0, %c0_i32 : i32, i32
  }
}

module attributes {stable_mosaic.version = 11 : i64} {
  func.func @kernel(%arg0: i32, %arg1: memref<16x256xf32, #tpu.memory_space<vmem>>, %arg2: memref<16x256xf32, #tpu.memory_space<vmem>>, %arg3: memref<1x128xf32, #tpu.memory_space<vmem>>) attributes {dimension_semantics = [#tpu.dimension_semantics<arbitrary>], iteration_bounds = array<i64: 1>, scalar_prefetch = 0 : i64, scratch_operands = 0 : i64, tpu.core_type = #tpu.core_type<tc>, window_params = [{transform_indices = @transform_0, window_bounds = array<i64: 16, 256>}, {transform_indices = @transform_1, window_bounds = array<i64: 16, 256>}, {transform_indices = @transform_2, window_bounds = array<i64: 1, 128>}]} {
    %c0 = arith.constant 0 : index
    %c0_0 = arith.constant 0 : index
    %0 = vector.load %arg1[%c0, %c0_0] : memref<16x256xf32, #tpu.memory_space<vmem>>, vector<16x256xf32>
    %c0_1 = arith.constant 0 : index
    %c0_2 = arith.constant 0 : index
    %1 = vector.load %arg2[%c0_1, %c0_2] : memref<16x256xf32, #tpu.memory_space<vmem>>, vector<16x256xf32>
    %cst = arith.constant dense<0xFF800000> : vector<16xf32>
    %2 = vector.multi_reduction <maximumf>, %0, %cst [1] : vector<16x256xf32> to vector<16xf32>
    %3 = vector.shape_cast %2 : vector<16xf32> to vector<16x1xf32>
    %4 = vector.broadcast %3 : vector<16x1xf32> to vector<16x256xf32>
    %5 = arith.subf %0, %4 : vector<16x256xf32>
    %6 = math.exp %5 : vector<16x256xf32>
    %cst_3 = arith.constant dense<0.000000e+00> : vector<16xf32>
    %7 = vector.multi_reduction <add>, %6, %cst_3 [1] : vector<16x256xf32> to vector<16xf32>
    %8 = vector.shape_cast %7 : vector<16xf32> to vector<16x1xf32>
    %9 = math.log %8 : vector<16x1xf32>
    %10 = arith.addf %9, %3 : vector<16x1xf32>
    %cst_4 = arith.constant dense<0xFF800000> : vector<16xf32>
    %11 = vector.multi_reduction <maximumf>, %1, %cst_4 [1] : vector<16x256xf32> to vector<16xf32>
    %12 = vector.shape_cast %11 : vector<16xf32> to vector<16x1xf32>
    %13 = vector.broadcast %12 : vector<16x1xf32> to vector<16x256xf32>
    %14 = arith.subf %1, %13 : vector<16x256xf32>
    %15 = math.exp %14 : vector<16x256xf32>
    %cst_5 = arith.constant dense<0.000000e+00> : vector<16xf32>
    %16 = vector.multi_reduction <add>, %15, %cst_5 [1] : vector<16x256xf32> to vector<16xf32>
    %17 = vector.shape_cast %16 : vector<16xf32> to vector<16x1xf32>
    %18 = math.log %17 : vector<16x1xf32>
    %19 = arith.addf %18, %12 : vector<16x1xf32>
    %20 = arith.subf %1, %0 : vector<16x256xf32>
    %21 = arith.mulf %15, %20 : vector<16x256xf32>
    %cst_6 = arith.constant dense<0.000000e+00> : vector<16xf32>
    %22 = vector.multi_reduction <add>, %21, %cst_6 [1] : vector<16x256xf32> to vector<16xf32>
    %23 = vector.shape_cast %22 : vector<16xf32> to vector<16x1xf32>
    %24 = tpu.reciprocal %17 : vector<16x1xf32> -> vector<16x1xf32>
    %25 = arith.mulf %23, %24 : vector<16x1xf32>
    %26 = arith.subf %10, %19 : vector<16x1xf32>
    %27 = arith.addf %25, %26 : vector<16x1xf32>
    %cst_7 = arith.constant dense<0.000000e+00> : vector<1xf32>
    %28 = vector.multi_reduction <add>, %27, %cst_7 [0] : vector<16x1xf32> to vector<1xf32>
    %29 = vector.shape_cast %28 : vector<1xf32> to vector<1x1xf32>
    %30 = vector.shape_cast %29 : vector<1x1xf32> to vector<1x1xf32>
    %31 = vector.broadcast %30 : vector<1x1xf32> to vector<1x128xf32>
    %c0_8 = arith.constant 0 : index
    %c0_9 = arith.constant 0 : index
    %32 = vector.load %arg3[%c0_8, %c0_9] : memref<1x128xf32, #tpu.memory_space<vmem>>, vector<1x128xf32>
    tpu.vector_store %arg3[%c0_8, %c0_9], %31 {strides = array<i32>} : memref<1x128xf32, #tpu.memory_space<vmem>>, vector<1x128xf32>,
    return
  }
  func.func @transform_0(%arg0: i32) -> (i32, i32) {
    %c0_i32 = arith.constant 0 : i32
    %c0_i32_0 = arith.constant 0 : i32
    return %arg0, %c0_i32 : i32, i32
  }
  func.func @transform_1(%arg0: i32) -> (i32, i32) {
    %c0_i32 = arith.constant 0 : i32
    %c0_i32_0 = arith.constant 0 : i32
    return %arg0, %c0_i32 : i32, i32
  }
  func.func @transform_2(%arg0: i32) -> (i32, i32) {
    %c0_i32 = arith.constant 0 : i32
    %c0_i32_0 = arith.constant 0 : i32
    return %arg0, %c0_i32 : i32, i32
  }
}

module attributes {stable_mosaic.version = 11 : i64} {
  func.func @kernel(%arg0: i32, %arg1: memref<16x256xf32, #tpu.memory_space<vmem>>, %arg2: memref<16x256xf32, #tpu.memory_space<vmem>>, %arg3: memref<1x128xf32, #tpu.memory_space<vmem>>) attributes {dimension_semantics = [#tpu.dimension_semantics<arbitrary>], iteration_bounds = array<i64: 1>, scalar_prefetch = 0 : i64, scratch_operands = 0 : i64, tpu.core_type = #tpu.core_type<tc>, window_params = [{transform_indices = @transform_0, window_bounds = array<i64: 16, 256>}, {transform_indices = @transform_1, window_bounds = array<i64: 16, 256>}, {transform_indices = @transform_2, window_bounds = array<i64: 1, 128>}]} {
    %c0 = arith.constant 0 : index
    %c0_0 = arith.constant 0 : index
    %0 = vector.load %arg1[%c0, %c0_0] : memref<16x256xf32, #tpu.memory_space<vmem>>, vector<16x256xf32>
    %c0_1 = arith.constant 0 : index
    %c0_2 = arith.constant 0 : index
    %1 = vector.load %arg2[%c0_1, %c0_2] : memref<16x256xf32, #tpu.memory_space<vmem>>, vector<16x256xf32>
    %cst = arith.constant dense<0xFF800000> : vector<16xf32>
    %2 = vector.multi_reduction <maximumf>, %0, %cst [1] : vector<16x256xf32> to vector<16xf32>
    %3 = vector.shape_cast %2 : vector<16xf32> to vector<16x1xf32>
    %4 = vector.broadcast %3 : vector<16x1xf32> to vector<16x256xf32>
    %5 = arith.subf %0, %4 : vector<16x256xf32>
    %6 = math.exp %5 : vector<16x256xf32>
    %cst_3 = arith.constant dense<0.000000e+00> : vector<16xf32>
    %7 = vector.multi_reduction <add>, %6, %cst_3 [1] : vector<16x256xf32> to vector<16xf32>
    %8 = vector.shape_cast %7 : vector<16xf32> to vector<16x1xf32>
    %9 = math.log %8 : vector<16x1xf32>
    %10 = arith.addf %9, %3 : vector<16x1xf32>
    %cst_4 = arith.constant dense<0xFF800000> : vector<16xf32>
    %11 = vector.multi_reduction <maximumf>, %1, %cst_4 [1] : vector<16x256xf32> to vector<16xf32>
    %12 = vector.shape_cast %11 : vector<16xf32> to vector<16x1xf32>
    %13 = vector.broadcast %12 : vector<16x1xf32> to vector<16x256xf32>
    %14 = arith.subf %1, %13 : vector<16x256xf32>
    %15 = math.exp %14 : vector<16x256xf32>
    %cst_5 = arith.constant dense<0.000000e+00> : vector<16xf32>
    %16 = vector.multi_reduction <add>, %15, %cst_5 [1] : vector<16x256xf32> to vector<16xf32>
    %17 = vector.shape_cast %16 : vector<16xf32> to vector<16x1xf32>
    %18 = math.log %17 : vector<16x1xf32>
    %19 = arith.addf %18, %12 : vector<16x1xf32>
    %20 = arith.subf %1, %0 : vector<16x256xf32>
    %21 = arith.mulf %15, %20 : vector<16x256xf32>
    %cst_6 = arith.constant dense<0.000000e+00> : vector<16xf32>
    %22 = vector.multi_reduction <add>, %21, %cst_6 [1] : vector<16x256xf32> to vector<16xf32>
    %23 = vector.shape_cast %22 : vector<16xf32> to vector<16x1xf32>
    %24 = tpu.reciprocal %17 : vector<16x1xf32> -> vector<16x1xf32>
    %25 = arith.mulf %23, %24 : vector<16x1xf32>
    %26 = arith.subf %10, %19 : vector<16x1xf32>
    %27 = arith.addf %25, %26 : vector<16x1xf32>
    %cst_7 = arith.constant dense<0.000000e+00> : vector<1xf32>
    %28 = vector.multi_reduction <add>, %27, %cst_7 [0] : vector<16x1xf32> to vector<1xf32>
    %29 = vector.shape_cast %28 : vector<1xf32> to vector<1x1xf32>
    %30 = vector.shape_cast %29 : vector<1x1xf32> to vector<1x1xf32>
    %31 = vector.broadcast %30 : vector<1x1xf32> to vector<1x128xf32>
    %c0_8 = arith.constant 0 : index
    %c0_9 = arith.constant 0 : index
    %32 = vector.load %arg3[%c0_8, %c0_9] : memref<1x128xf32, #tpu.memory_space<vmem>>, vector<1x128xf32>
    tpu.vector_store %arg3[%c0_8, %c0_9], %31 {strides = array<i32>} : memref<1x128xf32, #tpu.memory_space<vmem>>, vector<1x128xf32>,
    return
  }
  func.func @transform_0(%arg0: i32) -> (i32, i32) {
    %c0_i32 = arith.constant 0 : i32
    %c0_i32_0 = arith.constant 0 : i32
    return %arg0, %c0_i32 : i32, i32
  }
  func.func @transform_1(%arg0: i32) -> (i32, i32) {
    %c0_i32 = arith.constant 0 : i32
    %c0_i32_0 = arith.constant 0 : i32
    return %arg0, %c0_i32 : i32, i32
  }
  func.func @transform_2(%arg0: i32) -> (i32, i32) {
    %c0_i32 = arith.constant 0 : i32
    %c0_i32_0 = arith.constant 0 : i32
    return %arg0, %c0_i32 : i32, i32
  }
}

module attributes {stable_mosaic.version = 11 : i64} {
  func.func @kernel(%arg0: i32, %arg1: memref<16x256xf32, #tpu.memory_space<vmem>>, %arg2: memref<16x256xf32, #tpu.memory_space<vmem>>, %arg3: memref<1x128xf32, #tpu.memory_space<vmem>>) attributes {dimension_semantics = [#tpu.dimension_semantics<arbitrary>], iteration_bounds = array<i64: 1>, scalar_prefetch = 0 : i64, scratch_operands = 0 : i64, tpu.core_type = #tpu.core_type<tc>, window_params = [{transform_indices = @transform_0, window_bounds = array<i64: 16, 256>}, {transform_indices = @transform_1, window_bounds = array<i64: 16, 256>}, {transform_indices = @transform_2, window_bounds = array<i64: 1, 128>}]} {
    %c0 = arith.constant 0 : index
    %c0_0 = arith.constant 0 : index
    %0 = vector.load %arg1[%c0, %c0_0] : memref<16x256xf32, #tpu.memory_space<vmem>>, vector<16x256xf32>
    %c0_1 = arith.constant 0 : index
    %c0_2 = arith.constant 0 : index
    %1 = vector.load %arg2[%c0_1, %c0_2] : memref<16x256xf32, #tpu.memory_space<vmem>>, vector<16x256xf32>
    %cst = arith.constant dense<0xFF800000> : vector<16xf32>
    %2 = vector.multi_reduction <maximumf>, %0, %cst [1] : vector<16x256xf32> to vector<16xf32>
    %3 = vector.shape_cast %2 : vector<16xf32> to vector<16x1xf32>
    %4 = vector.broadcast %3 : vector<16x1xf32> to vector<16x256xf32>
    %5 = arith.subf %0, %4 : vector<16x256xf32>
    %6 = math.exp %5 : vector<16x256xf32>
    %cst_3 = arith.constant dense<0.000000e+00> : vector<16xf32>
    %7 = vector.multi_reduction <add>, %6, %cst_3 [1] : vector<16x256xf32> to vector<16xf32>
    %8 = vector.shape_cast %7 : vector<16xf32> to vector<16x1xf32>
    %9 = math.log %8 : vector<16x1xf32>
    %10 = arith.addf %9, %3 : vector<16x1xf32>
    %cst_4 = arith.constant dense<0xFF800000> : vector<16xf32>
    %11 = vector.multi_reduction <maximumf>, %1, %cst_4 [1] : vector<16x256xf32> to vector<16xf32>
    %12 = vector.shape_cast %11 : vector<16xf32> to vector<16x1xf32>
    %13 = vector.broadcast %12 : vector<16x1xf32> to vector<16x256xf32>
    %14 = arith.subf %1, %13 : vector<16x256xf32>
    %15 = math.exp %14 : vector<16x256xf32>
    %cst_5 = arith.constant dense<0.000000e+00> : vector<16xf32>
    %16 = vector.multi_reduction <add>, %15, %cst_5 [1] : vector<16x256xf32> to vector<16xf32>
    %17 = vector.shape_cast %16 : vector<16xf32> to vector<16x1xf32>
    %18 = math.log %17 : vector<16x1xf32>
    %19 = arith.addf %18, %12 : vector<16x1xf32>
    %20 = arith.subf %1, %0 : vector<16x256xf32>
    %21 = arith.mulf %15, %20 : vector<16x256xf32>
    %cst_6 = arith.constant dense<0.000000e+00> : vector<16xf32>
    %22 = vector.multi_reduction <add>, %21, %cst_6 [1] : vector<16x256xf32> to vector<16xf32>
    %23 = vector.shape_cast %22 : vector<16xf32> to vector<16x1xf32>
    %24 = tpu.reciprocal %17 : vector<16x1xf32> -> vector<16x1xf32>
    %25 = arith.mulf %23, %24 : vector<16x1xf32>
    %26 = arith.subf %10, %19 : vector<16x1xf32>
    %27 = arith.addf %25, %26 : vector<16x1xf32>
    %cst_7 = arith.constant dense<0.000000e+00> : vector<1xf32>
    %28 = vector.multi_reduction <add>, %27, %cst_7 [0] : vector<16x1xf32> to vector<1xf32>
    %29 = vector.shape_cast %28 : vector<1xf32> to vector<1x1xf32>
    %30 = vector.shape_cast %29 : vector<1x1xf32> to vector<1x1xf32>
    %31 = vector.broadcast %30 : vector<1x1xf32> to vector<1x128xf32>
    %c0_8 = arith.constant 0 : index
    %c0_9 = arith.constant 0 : index
    %32 = vector.load %arg3[%c0_8, %c0_9] : memref<1x128xf32, #tpu.memory_space<vmem>>, vector<1x128xf32>
    tpu.vector_store %arg3[%c0_8, %c0_9], %31 {strides = array<i32>} : memref<1x128xf32, #tpu.memory_space<vmem>>, vector<1x128xf32>,
    return
  }
  func.func @transform_0(%arg0: i32) -> (i32, i32) {
    %c0_i32 = arith.constant 0 : i32
    %c0_i32_0 = arith.constant 0 : i32
    return %arg0, %c0_i32 : i32, i32
  }
  func.func @transform_1(%arg0: i32) -> (i32, i32) {
    %c0_i32 = arith.constant 0 : i32
    %c0_i32_0 = arith.constant 0 : i32
    return %arg0, %c0_i32 : i32, i32
  }
  func.func @transform_2(%arg0: i32) -> (i32, i32) {
    %c0_i32 = arith.constant 0 : i32
    %c0_i32_0 = arith.constant 0 : i32
    return %arg0, %c0_i32 : i32, i32
  }
}

</mosaic_0001>

<llo_original>
// kernel: fn.1
$region0: #{fn.1}
  #allocation0 [shape = 'u32[]', space=smem, size = 0x4, offset = 0x4, fixed_abs, tag = 'smem constant byte address 0x4 - core index']
  #allocation1 [shape = 'u32[144,128]{1,0:T(1,128)}', space=vmem, size = 0x12000, scoped, tag = 'internal scratch']
  %s0 = inlined_call_operand.hbm [shape: f32[16,256], index: 0, kind: input, shape index: {}]
  %s1 = inlined_call_operand.hbm [shape: f32[16,256], index: 1, kind: input, shape index: {}]
  %s2 = inlined_call_operand.vmem [shape: f32[1,128], index: 2, kind: output, shape index: {}]
  %s3 = sld [smem:[#allocation0]]
  $region26: #{fn.1} parent=0
    _
  %s5 = ssub.s32 1, %s3
  %s6 = scalar_select 0, %s5, %s3
  $region1: #{fn.1} parent=0
    #allocation2 [shape = 'u8[16384]{0}', space=vmem, size = 0x4000, scoped, tag = 'input window, operand 0, single buffered']
    #allocation3 [shape = 's32[1]{0}', space=sflag, size = 0x4, scoped, tag = 'scoped memory for fn.1']
    #allocation4 [shape = 'u8[16384]{0}', space=vmem, size = 0x4000, scoped, tag = 'input window, operand 1, single buffered']
    #allocation5 [shape = 's32[1]{0}', space=sflag, size = 0x4, scoped, tag = 'scoped memory for fn.1']
    %7 = vsyncpa [#allocation3], 0
    %8 = vsyncpa [#allocation5], 0
    // Predicated region
    $region2: #{fn.1} parent=1 // pred_check
      _
    $region3: #{fn.1} parent=1 // pred_check_branch
      %10 = sbr.rel (0) target = $region5
    $region4: #{fn.1} parent=1 // pred_region
      %s12 = ssub.s32 512, 512
      %13 = vsyncadd [#allocation3], %s12
      %s14 = sshll.u32 [#allocation2], 4
      %s15 = int_to_ptr.vmem [resolvable:$true] %s14
      %20 = dma.hbm_to_vmem [thread:$0]  %s0, 512, %s15, [#allocation3], 256, 256, 16
    $region5: #{fn.1} parent=1 // pred_fallthru
      _
    // Predicated region
    $region6: #{fn.1} parent=1 // pred_check
      _
    $region7: #{fn.1} parent=1 // pred_check_branch
      %22 = sbr.rel (0) target = $region9
    $region8: #{fn.1} parent=1 // pred_region
      %s24 = ssub.s32 512, 512
      %25 = vsyncadd [#allocation5], %s24
      %s26 = sshll.u32 [#allocation4], 4
      %s27 = int_to_ptr.vmem [resolvable:$true] %s26
      %32 = dma.hbm_to_vmem [thread:$0]  %s1, 512, %s27, [#allocation5], 256, 256, 16
    $region9: #{fn.1} parent=1 // pred_fallthru
      _
    // Predicated region
    $region10: #{fn.1} parent=1 // pred_check
      _
    $region11: #{fn.1} parent=1 // pred_check_branch
      %34 = sbr.rel (0) target = $region13
    $region12: #{fn.1} parent=1 // pred_region
      %35 = dma.done [#allocation3], 512
    $region13: #{fn.1} parent=1 // pred_fallthru
      _
    // Predicated region
    $region14: #{fn.1} parent=1 // pred_check
      _
    $region15: #{fn.1} parent=1 // pred_check_branch
      %37 = sbr.rel (0) target = $region17
    $region16: #{fn.1} parent=1 // pred_region
      %38 = dma.done [#allocation5], 512
    $region17: #{fn.1} parent=1 // pred_fallthru
      _
    %v39 = vld [vmem:[#allocation2] sm:$0xff]
    %v40 = vld [vmem:[#allocation2 + $0x8] sm:$0xff]
    %v41 = vld [vmem:[#allocation2 + $0x10] sm:$0xff]
    %v42 = vld [vmem:[#allocation2 + $0x18] sm:$0xff]
    %v43 = vld [vmem:[#allocation4] sm:$0xff]
    %v44 = vld [vmem:[#allocation4 + $0x8] sm:$0xff]
    %v45 = vld [vmem:[#allocation4 + $0x10] sm:$0xff]
    %v46 = vld [vmem:[#allocation4 + $0x18] sm:$0xff]
    %v47 = vmax.f32 %v39, %v40
    %48 = vmax.xlane.f32.xlu0 %v47
    %v49 = vpop.xlane.xlu0 %48
    %v50 = vmax.f32 %v41, %v42
    %51 = vmax.xlane.f32.xlu0 %v50
    %v52 = vpop.xlane.xlu0 %51
    %v53 = vsub.f32 %v39, %v49
    %v54 = vsub.f32 %v40, %v49
    %v55 = vsub.f32 %v41, %v52
    %v56 = vsub.f32 %v42, %v52
    %v57 = vmul.f32 %v53, 1.442695
    %v58 = vpow.pop %v57
    %v59 = vmul.f32 %v54, 1.442695
    %v60 = vpow.pop %v59
    %v61 = vmul.f32 %v55, 1.442695
    %v62 = vpow.pop %v61
    %v63 = vmul.f32 %v56, 1.442695
    %v64 = vpow.pop %v63
    %v65 = vadd.f32 %v58, %v60
    %66 = vadd.xlane.f32.xlu0 %v65
    %v67 = vpop.xlane.xlu0 %66
    %v68 = vadd.f32 %v62, %v64
    %69 = vadd.xlane.f32.xlu0 %v68
    %v70 = vpop.xlane.xlu0 %69
    %v71 = vlog2.pop %v67
    %v72 = vmul.f32 %v71, 0.6931472
    %v73 = vlog2.pop %v70
    %v74 = vmul.f32 %v73, 0.6931472
    %v75 = vadd.f32 %v72, %v49
    %v76 = vadd.f32 %v74, %v52
    %v77 = vmax.f32 %v43, %v44
    %78 = vmax.xlane.f32.xlu0 %v77
    %v79 = vpop.xlane.xlu0 %78
    %v80 = vmax.f32 %v45, %v46
    %81 = vmax.xlane.f32.xlu0 %v80
    %v82 = vpop.xlane.xlu0 %81
    %v83 = vsub.f32 %v43, %v79
    %v84 = vsub.f32 %v44, %v79
    %v85 = vsub.f32 %v45, %v82
    %v86 = vsub.f32 %v46, %v82
    %v87 = vmul.f32 %v83, 1.442695
    %v88 = vpow.pop %v87
    %v89 = vmul.f32 %v84, 1.442695
    %v90 = vpow.pop %v89
    %v91 = vmul.f32 %v85, 1.442695
    %v92 = vpow.pop %v91
    %v93 = vmul.f32 %v86, 1.442695
    %v94 = vpow.pop %v93
    %v95 = vadd.f32 %v88, %v90
    %96 = vadd.xlane.f32.xlu0 %v95
    %v97 = vpop.xlane.xlu0 %96
    %v98 = vadd.f32 %v92, %v94
    %99 = vadd.xlane.f32.xlu0 %v98
    %v100 = vpop.xlane.xlu0 %99
    %v101 = vlog2.pop %v97
    %v102 = vmul.f32 %v101, 0.6931472
    %v103 = vlog2.pop %v100
    %v104 = vmul.f32 %v103, 0.6931472
    %v105 = vadd.f32 %v102, %v79
    %v106 = vadd.f32 %v104, %v82
    %v107 = vsub.f32 %v43, %v39
    %v108 = vsub.f32 %v44, %v40
    %v109 = vsub.f32 %v45, %v41
    %v110 = vsub.f32 %v46, %v42
    %v111 = vmul.f32 %v88, %v107
    %v112 = vmul.f32 %v90, %v108
    %v113 = vmul.f32 %v92, %v109
    %v114 = vmul.f32 %v94, %v110
    %v115 = vadd.f32 %v111, %v112
    %116 = vadd.xlane.f32.xlu0 %v115
    %v117 = vpop.xlane.xlu0 %116
    %v118 = vadd.f32 %v113, %v114
    %119 = vadd.xlane.f32.xlu0 %v118
    %v120 = vpop.xlane.xlu0 %119
    %v121 = vrcp.pop %v97
    %v122 = vrcp.pop %v100
    %v123 = vmul.f32 %v117, %v121
    %v124 = vmul.f32 %v120, %v122
    %v125 = vsub.f32 %v75, %v105
    %v126 = vsub.f32 %v76, %v106
    %v127 = vadd.f32 %v123, %v125
    %v128 = vadd.f32 %v124, %v126
    %v129 = vadd.f32 %v127, %v128
    %v130 = vrot.slane %v129, 4
    %v131 = vadd.f32 %v129, %v130
    %v132 = vrot.slane %v131, 2
    %v133 = vadd.f32 %v131, %v132
    %v134 = vrot.slane %v133, 1
    %v135 = vadd.f32 %v133, %v134
    %136 = vst [vmem:[%s2] sm:$0x1] %v135
    // Predicated region
    $region18: #{fn.1} parent=1 // pred_check
      _
    $region19: #{fn.1} parent=1 // pred_check_branch
      %138 = sbr.rel (0) target = $region21
    $region20: #{fn.1} parent=1 // pred_region
      _
    $region21: #{fn.1} parent=1 // pred_fallthru
      _
    // Predicated region
    $region22: #{fn.1} parent=1 // pred_check
      _
    $region23: #{fn.1} parent=1 // pred_check_branch
      %140 = sbr.rel (0) target = $region25
    $region24: #{fn.1} parent=1 // pred_region
      _
    $region25: #{fn.1} parent=1 // pred_fallthru
      _
    %141 = vsyncpa [#allocation3], 1
    %142 = vsyncpa [#allocation5], 1

// kernel: fn.1
$region0: #{fn.1}
  #allocation0 [shape = 'u32[]', space=smem, size = 0x4, offset = 0x4, fixed_abs, tag = 'smem constant byte address 0x4 - core index']
  #allocation1 [shape = 'u32[144,128]{1,0:T(1,128)}', space=vmem, size = 0x12000, scoped, tag = 'internal scratch']
  %s0 = inlined_call_operand.hbm [shape: f32[16,256], index: 0, kind: input, shape index: {}]
  %s1 = inlined_call_operand.hbm [shape: f32[16,256], index: 1, kind: input, shape index: {}]
  %s2 = inlined_call_operand.vmem [shape: f32[1,128], index: 2, kind: output, shape index: {}]
  %s3 = sld [smem:[#allocation0]]
  $region26: #{fn.1} parent=0
    _
  %s5 = ssub.s32 1, %s3
  %s6 = scalar_select 0, %s5, %s3
  $region1: #{fn.1} parent=0
    #allocation2 [shape = 'u8[16384]{0}', space=vmem, size = 0x4000, scoped, tag = 'input window, operand 0, single buffered']
    #allocation3 [shape = 's32[1]{0}', space=sflag, size = 0x4, scoped, tag = 'scoped memory for fn.1']
    #allocation4 [shape = 'u8[16384]{0}', space=vmem, size = 0x4000, scoped, tag = 'input window, operand 1, single buffered']
    #allocation5 [shape = 's32[1]{0}', space=sflag, size = 0x4, scoped, tag = 'scoped memory for fn.1']
    %7 = vsyncpa [#allocation3], 0
    %8 = vsyncpa [#allocation5], 0
    // Predicated region
    $region2: #{fn.1} parent=1 // pred_check
      _
    $region3: #{fn.1} parent=1 // pred_check_branch
      %10 = sbr.rel (0) target = $region5
    $region4: #{fn.1} parent=1 // pred_region
      %s12 = ssub.s32 512, 512
      %13 = vsyncadd [#allocation3], %s12
      %s14 = sshll.u32 [#allocation2], 4
      %s15 = int_to_ptr.vmem [resolvable:$true] %s14
      %20 = dma.hbm_to_vmem [thread:$0]  %s0, 512, %s15, [#allocation3], 256, 256, 16
    $region5: #{fn.1} parent=1 // pred_fallthru
      _
    // Predicated region
    $region6: #{fn.1} parent=1 // pred_check
      _
    $region7: #{fn.1} parent=1 // pred_check_branch
      %22 = sbr.rel (0) target = $region9
    $region8: #{fn.1} parent=1 // pred_region
      %s24 = ssub.s32 512, 512
      %25 = vsyncadd [#allocation5], %s24
      %s26 = sshll.u32 [#allocation4], 4
      %s27 = int_to_ptr.vmem [resolvable:$true] %s26
      %32 = dma.hbm_to_vmem [thread:$0]  %s1, 512, %s27, [#allocation5], 256, 256, 16
    $region9: #{fn.1} parent=1 // pred_fallthru
      _
    // Predicated region
    $region10: #{fn.1} parent=1 // pred_check
      _
    $region11: #{fn.1} parent=1 // pred_check_branch
      %34 = sbr.rel (0) target = $region13
    $region12: #{fn.1} parent=1 // pred_region
      %35 = dma.done [#allocation3], 512
    $region13: #{fn.1} parent=1 // pred_fallthru
      _
    // Predicated region
    $region14: #{fn.1} parent=1 // pred_check
      _
    $region15: #{fn.1} parent=1 // pred_check_branch
      %37 = sbr.rel (0) target = $region17
    $region16: #{fn.1} parent=1 // pred_region
      %38 = dma.done [#allocation5], 512
    $region17: #{fn.1} parent=1 // pred_fallthru
      _
    %v39 = vld [vmem:[#allocation2] sm:$0xff]
    %v40 = vld [vmem:[#allocation2 + $0x8] sm:$0xff]
    %v41 = vld [vmem:[#allocation2 + $0x10] sm:$0xff]
    %v42 = vld [vmem:[#allocation2 + $0x18] sm:$0xff]
    %v43 = vld [vmem:[#allocation4] sm:$0xff]
    %v44 = vld [vmem:[#allocation4 + $0x8] sm:$0xff]
    %v45 = vld [vmem:[#allocation4 + $0x10] sm:$0xff]
    %v46 = vld [vmem:[#allocation4 + $0x18] sm:$0xff]
    %v47 = vmax.f32 %v39, %v40
    %48 = vmax.xlane.f32.xlu0 %v47
    %v49 = vpop.xlane.xlu0 %48
    %v50 = vmax.f32 %v41, %v42
    %51 = vmax.xlane.f32.xlu0 %v50
    %v52 = vpop.xlane.xlu0 %51
    %v53 = vsub.f32 %v39, %v49
    %v54 = vsub.f32 %v40, %v49
    %v55 = vsub.f32 %v41, %v52
    %v56 = vsub.f32 %v42, %v52
    %v57 = vmul.f32 %v53, 1.442695
    %v58 = vpow.pop %v57
    %v59 = vmul.f32 %v54, 1.442695
    %v60 = vpow.pop %v59
    %v61 = vmul.f32 %v55, 1.442695
    %v62 = vpow.pop %v61
    %v63 = vmul.f32 %v56, 1.442695
    %v64 = vpow.pop %v63
    %v65 = vadd.f32 %v58, %v60
    %66 = vadd.xlane.f32.xlu0 %v65
    %v67 = vpop.xlane.xlu0 %66
    %v68 = vadd.f32 %v62, %v64
    %69 = vadd.xlane.f32.xlu0 %v68
    %v70 = vpop.xlane.xlu0 %69
    %v71 = vlog2.pop %v67
    %v72 = vmul.f32 %v71, 0.6931472
    %v73 = vlog2.pop %v70
    %v74 = vmul.f32 %v73, 0.6931472
    %v75 = vadd.f32 %v72, %v49
    %v76 = vadd.f32 %v74, %v52
    %v77 = vmax.f32 %v43, %v44
    %78 = vmax.xlane.f32.xlu0 %v77
    %v79 = vpop.xlane.xlu0 %78
    %v80 = vmax.f32 %v45, %v46
    %81 = vmax.xlane.f32.xlu0 %v80
    %v82 = vpop.xlane.xlu0 %81
    %v83 = vsub.f32 %v43, %v79
    %v84 = vsub.f32 %v44, %v79
    %v85 = vsub.f32 %v45, %v82
    %v86 = vsub.f32 %v46, %v82
    %v87 = vmul.f32 %v83, 1.442695
    %v88 = vpow.pop %v87
    %v89 = vmul.f32 %v84, 1.442695
    %v90 = vpow.pop %v89
    %v91 = vmul.f32 %v85, 1.442695
    %v92 = vpow.pop %v91
    %v93 = vmul.f32 %v86, 1.442695
    %v94 = vpow.pop %v93
    %v95 = vadd.f32 %v88, %v90
    %96 = vadd.xlane.f32.xlu0 %v95
    %v97 = vpop.xlane.xlu0 %96
    %v98 = vadd.f32 %v92, %v94
    %99 = vadd.xlane.f32.xlu0 %v98
    %v100 = vpop.xlane.xlu0 %99
    %v101 = vlog2.pop %v97
    %v102 = vmul.f32 %v101, 0.6931472
    %v103 = vlog2.pop %v100
    %v104 = vmul.f32 %v103, 0.6931472
    %v105 = vadd.f32 %v102, %v79
    %v106 = vadd.f32 %v104, %v82
    %v107 = vsub.f32 %v43, %v39
    %v108 = vsub.f32 %v44, %v40
    %v109 = vsub.f32 %v45, %v41
    %v110 = vsub.f32 %v46, %v42
    %v111 = vmul.f32 %v88, %v107
    %v112 = vmul.f32 %v90, %v108
    %v113 = vmul.f32 %v92, %v109
    %v114 = vmul.f32 %v94, %v110
    %v115 = vadd.f32 %v111, %v112
    %116 = vadd.xlane.f32.xlu0 %v115
    %v117 = vpop.xlane.xlu0 %116
    %v118 = vadd.f32 %v113, %v114
    %119 = vadd.xlane.f32.xlu0 %v118
    %v120 = vpop.xlane.xlu0 %119
    %v121 = vrcp.pop %v97
    %v122 = vrcp.pop %v100
    %v123 = vmul.f32 %v117, %v121
    %v124 = vmul.f32 %v120, %v122
    %v125 = vsub.f32 %v75, %v105
    %v126 = vsub.f32 %v76, %v106
    %v127 = vadd.f32 %v123, %v125
    %v128 = vadd.f32 %v124, %v126
    %v129 = vadd.f32 %v127, %v128
    %v130 = vrot.slane %v129, 4
    %v131 = vadd.f32 %v129, %v130
    %v132 = vrot.slane %v131, 2
    %v133 = vadd.f32 %v131, %v132
    %v134 = vrot.slane %v133, 1
    %v135 = vadd.f32 %v133, %v134
    %136 = vst [vmem:[%s2] sm:$0x1] %v135
    // Predicated region
    $region18: #{fn.1} parent=1 // pred_check
      _
    $region19: #{fn.1} parent=1 // pred_check_branch
      %138 = sbr.rel (0) target = $region21
    $region20: #{fn.1} parent=1 // pred_region
      _
    $region21: #{fn.1} parent=1 // pred_fallthru
      _
    // Predicated region
    $region22: #{fn.1} parent=1 // pred_check
      _
    $region23: #{fn.1} parent=1 // pred_check_branch
      %140 = sbr.rel (0) target = $region25
    $region24: #{fn.1} parent=1 // pred_region
      _
    $region25: #{fn.1} parent=1 // pred_fallthru
      _
    %141 = vsyncpa [#allocation3], 1
    %142 = vsyncpa [#allocation5], 1

// kernel: fn.1
$region0: #{fn.1}
  #allocation0 [shape = 'u32[]', space=smem, size = 0x4, offset = 0x4, fixed_abs, tag = 'smem constant byte address 0x4 - core index']
  #allocation1 [shape = 'u32[144,128]{1,0:T(1,128)}', space=vmem, size = 0x12000, scoped, tag = 'internal scratch']
  %s0 = inlined_call_operand.hbm [shape: f32[16,256], index: 0, kind: input, shape index: {}]
  %s1 = inlined_call_operand.hbm [shape: f32[16,256], index: 1, kind: input, shape index: {}]
  %s2 = inlined_call_operand.vmem [shape: f32[1,128], index: 2, kind: output, shape index: {}]
  %s3 = sld [smem:[#allocation0]]
  $region26: #{fn.1} parent=0
    _
  %s5 = ssub.s32 1, %s3
  %s6 = scalar_select 0, %s5, %s3
  $region1: #{fn.1} parent=0
    #allocation2 [shape = 'u8[16384]{0}', space=vmem, size = 0x4000, scoped, tag = 'input window, operand 0, single buffered']
    #allocation3 [shape = 's32[1]{0}', space=sflag, size = 0x4, scoped, tag = 'scoped memory for fn.1']
    #allocation4 [shape = 'u8[16384]{0}', space=vmem, size = 0x4000, scoped, tag = 'input window, operand 1, single buffered']
    #allocation5 [shape = 's32[1]{0}', space=sflag, size = 0x4, scoped, tag = 'scoped memory for fn.1']
    %7 = vsyncpa [#allocation3], 0
    %8 = vsyncpa [#allocation5], 0
    // Predicated region
    $region2: #{fn.1} parent=1 // pred_check
      _
    $region3: #{fn.1} parent=1 // pred_check_branch
      %10 = sbr.rel (0) target = $region5
    $region4: #{fn.1} parent=1 // pred_region
      %s12 = ssub.s32 512, 512
      %13 = vsyncadd [#allocation3], %s12
      %s14 = sshll.u32 [#allocation2], 4
      %s15 = int_to_ptr.vmem [resolvable:$true] %s14
      %20 = dma.hbm_to_vmem [thread:$0]  %s0, 512, %s15, [#allocation3], 256, 256, 16
    $region5: #{fn.1} parent=1 // pred_fallthru
      _
    // Predicated region
    $region6: #{fn.1} parent=1 // pred_check
      _
    $region7: #{fn.1} parent=1 // pred_check_branch
      %22 = sbr.rel (0) target = $region9
    $region8: #{fn.1} parent=1 // pred_region
      %s24 = ssub.s32 512, 512
      %25 = vsyncadd [#allocation5], %s24
      %s26 = sshll.u32 [#allocation4], 4
      %s27 = int_to_ptr.vmem [resolvable:$true] %s26
      %32 = dma.hbm_to_vmem [thread:$0]  %s1, 512, %s27, [#allocation5], 256, 256, 16
    $region9: #{fn.1} parent=1 // pred_fallthru
      _
    // Predicated region
    $region10: #{fn.1} parent=1 // pred_check
      _
    $region11: #{fn.1} parent=1 // pred_check_branch
      %34 = sbr.rel (0) target = $region13
    $region12: #{fn.1} parent=1 // pred_region
      %35 = dma.done [#allocation3], 512
    $region13: #{fn.1} parent=1 // pred_fallthru
      _
    // Predicated region
    $region14: #{fn.1} parent=1 // pred_check
      _
    $region15: #{fn.1} parent=1 // pred_check_branch
      %37 = sbr.rel (0) target = $region17
    $region16: #{fn.1} parent=1 // pred_region
      %38 = dma.done [#allocation5], 512
    $region17: #{fn.1} parent=1 // pred_fallthru
      _
    %v39 = vld [vmem:[#allocation2] sm:$0xff]
    %v40 = vld [vmem:[#allocation2 + $0x8] sm:$0xff]
    %v41 = vld [vmem:[#allocation2 + $0x10] sm:$0xff]
    %v42 = vld [vmem:[#allocation2 + $0x18] sm:$0xff]
    %v43 = vld [vmem:[#allocation4] sm:$0xff]
    %v44 = vld [vmem:[#allocation4 + $0x8] sm:$0xff]
    %v45 = vld [vmem:[#allocation4 + $0x10] sm:$0xff]
    %v46 = vld [vmem:[#allocation4 + $0x18] sm:$0xff]
    %v47 = vmax.f32 %v39, %v40
    %48 = vmax.xlane.f32.xlu0 %v47
    %v49 = vpop.xlane.xlu0 %48
    %v50 = vmax.f32 %v41, %v42
    %51 = vmax.xlane.f32.xlu0 %v50
    %v52 = vpop.xlane.xlu0 %51
    %v53 = vsub.f32 %v39, %v49
    %v54 = vsub.f32 %v40, %v49
    %v55 = vsub.f32 %v41, %v52
    %v56 = vsub.f32 %v42, %v52
    %v57 = vmul.f32 %v53, 1.442695
    %v58 = vpow.pop %v57
    %v59 = vmul.f32 %v54, 1.442695
    %v60 = vpow.pop %v59
    %v61 = vmul.f32 %v55, 1.442695
    %v62 = vpow.pop %v61
    %v63 = vmul.f32 %v56, 1.442695
    %v64 = vpow.pop %v63
    %v65 = vadd.f32 %v58, %v60
    %66 = vadd.xlane.f32.xlu0 %v65
    %v67 = vpop.xlane.xlu0 %66
    %v68 = vadd.f32 %v62, %v64
    %69 = vadd.xlane.f32.xlu0 %v68
    %v70 = vpop.xlane.xlu0 %69
    %v71 = vlog2.pop %v67
    %v72 = vmul.f32 %v71, 0.6931472
    %v73 = vlog2.pop %v70
    %v74 = vmul.f32 %v73, 0.6931472
    %v75 = vadd.f32 %v72, %v49
    %v76 = vadd.f32 %v74, %v52
    %v77 = vmax.f32 %v43, %v44
    %78 = vmax.xlane.f32.xlu0 %v77
    %v79 = vpop.xlane.xlu0 %78
    %v80 = vmax.f32 %v45, %v46
    %81 = vmax.xlane.f32.xlu0 %v80
    %v82 = vpop.xlane.xlu0 %81
    %v83 = vsub.f32 %v43, %v79
    %v84 = vsub.f32 %v44, %v79
    %v85 = vsub.f32 %v45, %v82
    %v86 = vsub.f32 %v46, %v82
    %v87 = vmul.f32 %v83, 1.442695
    %v88 = vpow.pop %v87
    %v89 = vmul.f32 %v84, 1.442695
    %v90 = vpow.pop %v89
    %v91 = vmul.f32 %v85, 1.442695
    %v92 = vpow.pop %v91
    %v93 = vmul.f32 %v86, 1.442695
    %v94 = vpow.pop %v93
    %v95 = vadd.f32 %v88, %v90
    %96 = vadd.xlane.f32.xlu0 %v95
    %v97 = vpop.xlane.xlu0 %96
    %v98 = vadd.f32 %v92, %v94
    %99 = vadd.xlane.f32.xlu0 %v98
    %v100 = vpop.xlane.xlu0 %99
    %v101 = vlog2.pop %v97
    %v102 = vmul.f32 %v101, 0.6931472
    %v103 = vlog2.pop %v100
    %v104 = vmul.f32 %v103, 0.6931472
    %v105 = vadd.f32 %v102, %v79
    %v106 = vadd.f32 %v104, %v82
    %v107 = vsub.f32 %v43, %v39
    %v108 = vsub.f32 %v44, %v40
    %v109 = vsub.f32 %v45, %v41
    %v110 = vsub.f32 %v46, %v42
    %v111 = vmul.f32 %v88, %v107
    %v112 = vmul.f32 %v90, %v108
    %v113 = vmul.f32 %v92, %v109
    %v114 = vmul.f32 %v94, %v110
    %v115 = vadd.f32 %v111, %v112
    %116 = vadd.xlane.f32.xlu0 %v115
    %v117 = vpop.xlane.xlu0 %116
    %v118 = vadd.f32 %v113, %v114
    %119 = vadd.xlane.f32.xlu0 %v118
    %v120 = vpop.xlane.xlu0 %119
    %v121 = vrcp.pop %v97
    %v122 = vrcp.pop %v100
    %v123 = vmul.f32 %v117, %v121
    %v124 = vmul.f32 %v120, %v122
    %v125 = vsub.f32 %v75, %v105
    %v126 = vsub.f32 %v76, %v106
    %v127 = vadd.f32 %v123, %v125
    %v128 = vadd.f32 %v124, %v126
    %v129 = vadd.f32 %v127, %v128
    %v130 = vrot.slane %v129, 4
    %v131 = vadd.f32 %v129, %v130
    %v132 = vrot.slane %v131, 2
    %v133 = vadd.f32 %v131, %v132
    %v134 = vrot.slane %v133, 1
    %v135 = vadd.f32 %v133, %v134
    %136 = vst [vmem:[%s2] sm:$0x1] %v135
    // Predicated region
    $region18: #{fn.1} parent=1 // pred_check
      _
    $region19: #{fn.1} parent=1 // pred_check_branch
      %138 = sbr.rel (0) target = $region21
    $region20: #{fn.1} parent=1 // pred_region
      _
    $region21: #{fn.1} parent=1 // pred_fallthru
      _
    // Predicated region
    $region22: #{fn.1} parent=1 // pred_check
      _
    $region23: #{fn.1} parent=1 // pred_check_branch
      %140 = sbr.rel (0) target = $region25
    $region24: #{fn.1} parent=1 // pred_region
      _
    $region25: #{fn.1} parent=1 // pred_fallthru
      _
    %141 = vsyncpa [#allocation3], 1
    %142 = vsyncpa [#allocation5], 1

// kernel: fn.1
$region0: #{fn.1}
  #allocation0 [shape = 'u32[]', space=smem, size = 0x4, offset = 0x4, fixed_abs, tag = 'smem constant byte address 0x4 - core index']
  #allocation1 [shape = 'u32[144,128]{1,0:T(1,128)}', space=vmem, size = 0x12000, scoped, tag = 'internal scratch']
  %s0 = inlined_call_operand.hbm [shape: f32[16,256], index: 0, kind: input, shape index: {}]
  %s1 = inlined_call_operand.hbm [shape: f32[16,256], index: 1, kind: input, shape index: {}]
  %s2 = inlined_call_operand.vmem [shape: f32[1,128], index: 2, kind: output, shape index: {}]
  %s3 = sld [smem:[#allocation0]]
  $region26: #{fn.1} parent=0
    _
  %s5 = ssub.s32 1, %s3
  %s6 = scalar_select 0, %s5, %s3
  $region1: #{fn.1} parent=0
    #allocation2 [shape = 'u8[16384]{0}', space=vmem, size = 0x4000, scoped, tag = 'input window, operand 0, single buffered']
    #allocation3 [shape = 's32[1]{0}', space=sflag, size = 0x4, scoped, tag = 'scoped memory for fn.1']
    #allocation4 [shape = 'u8[16384]{0}', space=vmem, size = 0x4000, scoped, tag = 'input window, operand 1, single buffered']
    #allocation5 [shape = 's32[1]{0}', space=sflag, size = 0x4, scoped, tag = 'scoped memory for fn.1']
    %7 = vsyncpa [#allocation3], 0
    %8 = vsyncpa [#allocation5], 0
    // Predicated region
    $region2: #{fn.1} parent=1 // pred_check
      _
    $region3: #{fn.1} parent=1 // pred_check_branch
      %10 = sbr.rel (0) target = $region5
    $region4: #{fn.1} parent=1 // pred_region
      %s12 = ssub.s32 512, 512
      %13 = vsyncadd [#allocation3], %s12
      %s14 = sshll.u32 [#allocation2], 4
      %s15 = int_to_ptr.vmem [resolvable:$true] %s14
      %20 = dma.hbm_to_vmem [thread:$0]  %s0, 512, %s15, [#allocation3], 256, 256, 16
    $region5: #{fn.1} parent=1 // pred_fallthru
      _
    // Predicated region
    $region6: #{fn.1} parent=1 // pred_check
      _
    $region7: #{fn.1} parent=1 // pred_check_branch
      %22 = sbr.rel (0) target = $region9
    $region8: #{fn.1} parent=1 // pred_region
      %s24 = ssub.s32 512, 512
      %25 = vsyncadd [#allocation5], %s24
      %s26 = sshll.u32 [#allocation4], 4
      %s27 = int_to_ptr.vmem [resolvable:$true] %s26
      %32 = dma.hbm_to_vmem [thread:$0]  %s1, 512, %s27, [#allocation5], 256, 256, 16
    $region9: #{fn.1} parent=1 // pred_fallthru
      _
    // Predicated region
    $region10: #{fn.1} parent=1 // pred_check
      _
    $region11: #{fn.1} parent=1 // pred_check_branch
      %34 = sbr.rel (0) target = $region13
    $region12: #{fn.1} parent=1 // pred_region
      %35 = dma.done [#allocation3], 512
    $region13: #{fn.1} parent=1 // pred_fallthru
      _
    // Predicated region
    $region14: #{fn.1} parent=1 // pred_check
      _
    $region15: #{fn.1} parent=1 // pred_check_branch
      %37 = sbr.rel (0) target = $region17
    $region16: #{fn.1} parent=1 // pred_region
      %38 = dma.done [#allocation5], 512
    $region17: #{fn.1} parent=1 // pred_fallthru
      _
    %v39 = vld [vmem:[#allocation2] sm:$0xff]
    %v40 = vld [vmem:[#allocation2 + $0x8] sm:$0xff]
    %v41 = vld [vmem:[#allocation2 + $0x10] sm:$0xff]
    %v42 = vld [vmem:[#allocation2 + $0x18] sm:$0xff]
    %v43 = vld [vmem:[#allocation4] sm:$0xff]
    %v44 = vld [vmem:[#allocation4 + $0x8] sm:$0xff]
    %v45 = vld [vmem:[#allocation4 + $0x10] sm:$0xff]
    %v46 = vld [vmem:[#allocation4 + $0x18] sm:$0xff]
    %v47 = vmax.f32 %v39, %v40
    %48 = vmax.xlane.f32.xlu0 %v47
    %v49 = vpop.xlane.xlu0 %48
    %v50 = vmax.f32 %v41, %v42
    %51 = vmax.xlane.f32.xlu0 %v50
    %v52 = vpop.xlane.xlu0 %51
    %v53 = vsub.f32 %v39, %v49
    %v54 = vsub.f32 %v40, %v49
    %v55 = vsub.f32 %v41, %v52
    %v56 = vsub.f32 %v42, %v52
    %v57 = vmul.f32 %v53, 1.442695
    %v58 = vpow.pop %v57
    %v59 = vmul.f32 %v54, 1.442695
    %v60 = vpow.pop %v59
    %v61 = vmul.f32 %v55, 1.442695
    %v62 = vpow.pop %v61
    %v63 = vmul.f32 %v56, 1.442695
    %v64 = vpow.pop %v63
    %v65 = vadd.f32 %v58, %v60
    %66 = vadd.xlane.f32.xlu0 %v65
    %v67 = vpop.xlane.xlu0 %66
    %v68 = vadd.f32 %v62, %v64
    %69 = vadd.xlane.f32.xlu0 %v68
    %v70 = vpop.xlane.xlu0 %69
    %v71 = vlog2.pop %v67
    %v72 = vmul.f32 %v71, 0.6931472
    %v73 = vlog2.pop %v70
    %v74 = vmul.f32 %v73, 0.6931472
    %v75 = vadd.f32 %v72, %v49
    %v76 = vadd.f32 %v74, %v52
    %v77 = vmax.f32 %v43, %v44
    %78 = vmax.xlane.f32.xlu0 %v77
    %v79 = vpop.xlane.xlu0 %78
    %v80 = vmax.f32 %v45, %v46
    %81 = vmax.xlane.f32.xlu0 %v80
    %v82 = vpop.xlane.xlu0 %81
    %v83 = vsub.f32 %v43, %v79
    %v84 = vsub.f32 %v44, %v79
    %v85 = vsub.f32 %v45, %v82
    %v86 = vsub.f32 %v46, %v82
    %v87 = vmul.f32 %v83, 1.442695
    %v88 = vpow.pop %v87
    %v89 = vmul.f32 %v84, 1.442695
    %v90 = vpow.pop %v89
    %v91 = vmul.f32 %v85, 1.442695
    %v92 = vpow.pop %v91
    %v93 = vmul.f32 %v86, 1.442695
    %v94 = vpow.pop %v93
    %v95 = vadd.f32 %v88, %v90
    %96 = vadd.xlane.f32.xlu0 %v95
    %v97 = vpop.xlane.xlu0 %96
    %v98 = vadd.f32 %v92, %v94
    %99 = vadd.xlane.f32.xlu0 %v98
    %v100 = vpop.xlane.xlu0 %99
    %v101 = vlog2.pop %v97
    %v102 = vmul.f32 %v101, 0.6931472
    %v103 = vlog2.pop %v100
    %v104 = vmul.f32 %v103, 0.6931472
    %v105 = vadd.f32 %v102, %v79
    %v106 = vadd.f32 %v104, %v82
    %v107 = vsub.f32 %v43, %v39
    %v108 = vsub.f32 %v44, %v40
    %v109 = vsub.f32 %v45, %v41
    %v110 = vsub.f32 %v46, %v42
    %v111 = vmul.f32 %v88, %v107
    %v112 = vmul.f32 %v90, %v108
    %v113 = vmul.f32 %v92, %v109
    %v114 = vmul.f32 %v94, %v110
    %v115 = vadd.f32 %v111, %v112
    %116 = vadd.xlane.f32.xlu0 %v115
    %v117 = vpop.xlane.xlu0 %116
    %v118 = vadd.f32 %v113, %v114
    %119 = vadd.xlane.f32.xlu0 %v118
    %v120 = vpop.xlane.xlu0 %119
    %v121 = vrcp.pop %v97
    %v122 = vrcp.pop %v100
    %v123 = vmul.f32 %v117, %v121
    %v124 = vmul.f32 %v120, %v122
    %v125 = vsub.f32 %v75, %v105
    %v126 = vsub.f32 %v76, %v106
    %v127 = vadd.f32 %v123, %v125
    %v128 = vadd.f32 %v124, %v126
    %v129 = vadd.f32 %v127, %v128
    %v130 = vrot.slane %v129, 4
    %v131 = vadd.f32 %v129, %v130
    %v132 = vrot.slane %v131, 2
    %v133 = vadd.f32 %v131, %v132
    %v134 = vrot.slane %v133, 1
    %v135 = vadd.f32 %v133, %v134
    %136 = vst [vmem:[%s2] sm:$0x1] %v135
    // Predicated region
    $region18: #{fn.1} parent=1 // pred_check
      _
    $region19: #{fn.1} parent=1 // pred_check_branch
      %138 = sbr.rel (0) target = $region21
    $region20: #{fn.1} parent=1 // pred_region
      _
    $region21: #{fn.1} parent=1 // pred_fallthru
      _
    // Predicated region
    $region22: #{fn.1} parent=1 // pred_check
      _
    $region23: #{fn.1} parent=1 // pred_check_branch
      %140 = sbr.rel (0) target = $region25
    $region24: #{fn.1} parent=1 // pred_region
      _
    $region25: #{fn.1} parent=1 // pred_fallthru
      _
    %141 = vsyncpa [#allocation3], 1
    %142 = vsyncpa [#allocation5], 1

</llo_original>
